<compile_context>
chip_gen: v6e
topology: v6e:2x2x1
jax: 0.10.0
libtpu: 0.0.40
codegen_flags: <defaults>
</compile_context>

<pallas_src>
import math
import functools

import jax
import jax.numpy as jnp
from jax.experimental import pallas as pl
from jax.experimental.pallas import tpu as pltpu


def _round_up(x, m):
    return ((x + m - 1) // m) * m


def _pick_tile(dim, candidates):
    """Largest candidate tile that divides `dim`; falls back to the full dim."""
    for c in candidates:
        if c <= dim and dim % c == 0:
            return c
    return dim


# ----------------------------- Tiled linear: x @ W + b -----------------------------
def _linear_kernel(x_ref, w_ref, b_ref, o_ref, acc_ref):
    k = pl.program_id(2)

    @pl.when(k == 0)
    def _():
        acc_ref[...] = jnp.zeros_like(acc_ref)

    acc_ref[...] += jnp.dot(x_ref[...], w_ref[...],
                            preferred_element_type=jnp.float32)

    @pl.when(k == pl.num_programs(2) - 1)
    def _():
        o_ref[...] = (acc_ref[...] + b_ref[...].astype(jnp.float32)).astype(o_ref.dtype)


def pallas_linear(x, w, b, *, out_dtype=None):
    """x: (M, K); w: (K, N) (torch weight transposed); b: (N,) f32. Returns (M, N)."""
    M, K = x.shape
    Kw, N = w.shape
    assert K == Kw and b.shape == (N,)
    out_dtype = out_dtype if out_dtype is not None else x.dtype

    tm = _pick_tile(M, (512, 256, 128, 64, 32, 16, 8))
    tn = _pick_tile(N, (512, 256, 128))
    tk = _pick_tile(K, (512, 256, 128))
    grid = (M // tm, N // tn, K // tk)

    return pl.pallas_call(
        _linear_kernel,
        out_shape=jax.ShapeDtypeStruct((M, N), out_dtype),
        grid_spec=pltpu.PrefetchScalarGridSpec(
            num_scalar_prefetch=0,
            grid=grid,
            in_specs=[
                pl.BlockSpec((tm, tk), lambda i, j, k: (i, k)),
                pl.BlockSpec((tk, tn), lambda i, j, k: (k, j)),
                pl.BlockSpec((1, tn), lambda i, j, k: (0, j)),
            ],
            out_specs=pl.BlockSpec((tm, tn), lambda i, j, k: (i, j)),
            scratch_shapes=[pltpu.VMEM((tm, tn), jnp.float32)],
        ),
        compiler_params=pltpu.CompilerParams(
            dimension_semantics=("parallel", "parallel", "arbitrary"),
            vmem_limit_bytes=32 * 1024 * 1024,
        ),
    )(x, w, b.reshape(1, N))


# -------------------- Flash-style SDPA (online softmax, head-major) --------------------
def _flash_attn_kernel(q_ref, k_ref, v_ref, o_ref, m_s, l_s, acc_s, *,
                       kv_len, kv_tile, needs_mask):
    ki = pl.program_id(1)

    @pl.when(ki == 0)
    def _():
        m_s[...] = jnp.full(m_s.shape, -jnp.inf, dtype=m_s.dtype)
        l_s[...] = jnp.zeros_like(l_s)
        acc_s[...] = jnp.zeros_like(acc_s)

    # Head-major blocks, native (bf16) dtype, 1/sqrt(Dh) already folded into Wq.
    q = q_ref[...]                       # (H, tq, Dh)
    k = k_ref[...]                       # (H, tk, Dh)
    v = v_ref[...]                       # (H, tk, Dh)

    # Per-head scores for this kv tile only: (H, tq, tk), f32 accumulation on the MXU.
    s = jnp.einsum("hqd,hkd->hqk", q, k, preferred_element_type=jnp.float32)

    if needs_mask:
        # Padded key rows (global index >= kv_len) only exist in the last kv tile,
        # and every tile is guaranteed to contain at least one real key.
        key_idx = ki * kv_tile + jax.lax.broadcasted_iota(jnp.int32, s.shape, 2)
        s = jnp.where(key_idx < kv_len, s, -1e30)

    m_prev = m_s[...]                                            # (H, tq, 1)
    m_new = jnp.maximum(m_prev, jnp.max(s, axis=-1, keepdims=True))
    alpha = jnp.exp(m_prev - m_new)                              # rescale running stats
    # TODO(synk): on v6e/v7x a bf16 exp here would roughly double EUP throughput;
    # kept f32 for cross-generation robustness (v5e has no bf16 EUP).
    p = jnp.exp(s - m_new)                                       # (H, tq, tk) f32
    l_s[...] = alpha * l_s[...] + jnp.sum(p, axis=-1, keepdims=True)
    acc_s[...] = alpha * acc_s[...] + jnp.einsum(
        "hqk,hkd->hqd", p.astype(v.dtype), v, preferred_element_type=jnp.float32)
    m_s[...] = m_new

    @pl.when(ki == pl.num_programs(1) - 1)
    def _():
        num_heads = acc_s.shape[0]
        inv_l = pl.reciprocal(l_s[...], approx=True)             # EUP, nearly free
        out = acc_s[...] * inv_l                                 # (H, tq, Dh) f32
        # Single lane-concat into a lane-dense (tq, H*Dh) slab; runs only once per
        # q tile (last kv step), so the relayout cost is fully amortized.
        out = jnp.concatenate([out[h] for h in range(num_heads)], axis=-1)
        o_ref[...] = out.astype(o_ref.dtype)


def pallas_flash_sdpa(qkv_hm, *, nnz, out_dtype):
    """qkv_hm: (3, H, M_pad, Dh) head-major packed projection (scale folded into Q).

    Returns (M_pad, H*Dh); rows >= nnz are junk and must be sliced off by the caller.
    """
    three, H, M_pad, Dh = qkv_hm.shape
    assert three == 3
    D = H * Dh

    # Large q tile raises arithmetic intensity (K/V re-reads ~ 1/tq); kv innermost.
    tq = _pick_tile(M_pad, (512, 256, 128, 64, 32, 16, 8))
    tk = _pick_tile(M_pad, (512, 256, 128, 64, 32, 16, 8))
    grid = (M_pad // tq, M_pad // tk)

    kernel = functools.partial(_flash_attn_kernel, kv_len=nnz, kv_tile=tk,
                               needs_mask=(M_pad != nnz))

    # Head-major blocks: each q/k/v block is H contiguous chunks of tq*Dh elements.
    q_spec = pl.BlockSpec((None, H, tq, Dh), lambda qi, ki: (0, 0, qi, 0))
    k_spec = pl.BlockSpec((None, H, tk, Dh), lambda qi, ki: (1, 0, ki, 0))
    v_spec = pl.BlockSpec((None, H, tk, Dh), lambda qi, ki: (2, 0, ki, 0))
    o_spec = pl.BlockSpec((tq, D), lambda qi, ki: (qi, 0))       # lane-dense output

    # TODO(synk): if profiling shows exposed K/V DMA, add pipeline_mode=pl.Buffered(3)
    # on k_spec/v_spec (re-check the 64 MiB VMEM budget on v7x first).
    return pl.pallas_call(
        kernel,
        out_shape=jax.ShapeDtypeStruct((M_pad, D), out_dtype),
        grid_spec=pltpu.PrefetchScalarGridSpec(
            num_scalar_prefetch=0,
            grid=grid,
            in_specs=[q_spec, k_spec, v_spec],
            out_specs=o_spec,
            scratch_shapes=[
                pltpu.VMEM((H, tq, 1), jnp.float32),   # running max  m
                pltpu.VMEM((H, tq, 1), jnp.float32),   # running sum  l
                pltpu.VMEM((H, tq, Dh), jnp.float32),  # output accumulator
            ],
        ),
        compiler_params=pltpu.CompilerParams(
            dimension_semantics=("parallel", "arbitrary"),
            vmem_limit_bytes=48 * 1024 * 1024,         # <= ~48 MiB: safe on v7x (64 MiB)
        ),
    )(qkv_hm, qkv_hm, qkv_hm)


# ------------------------------- Full forward pass -------------------------------
def bert_alibi_unpad_self_attention(hidden_states, cu_seqlens, max_seqlen, indices,
                                    attn_mask, bias, slopes, *,
                                    wqkv, bqkv, num_attention_heads,
                                    compute_dtype=jnp.bfloat16):
    # Vanilla (non-FA2) path with attention_probs_dropout_prob == 0. As in the reference
    # non-FA2 branch, cu_seqlens / attn_mask / bias / slopes are not consumed (the PyTorch
    # code calls SDPA on the packed tensors with no mask).
    # TODO(synk): attention_probs_dropout_prob > 0 and the FlashAttention-2 / ALiBi branch
    # (which consumes cu_seqlens / bias / slopes) are not implemented here.
    del cu_seqlens, max_seqlen, indices, attn_mask, bias, slopes
    nnz, dim = hidden_states.shape
    H = num_attention_heads
    assert dim % H == 0
    Dh = dim // H

    # Fold 1/sqrt(Dh) into the Q columns of Wqkv / bias (done once in XLA, free).
    scale = 1.0 / math.sqrt(Dh)
    w = jnp.concatenate([wqkv[:, :dim] * scale, wqkv[:, dim:]], axis=1)
    b = jnp.concatenate([bqkv[:dim] * scale, bqkv[dim:]], axis=0).astype(jnp.float32)

    # Pad the token axis so every tile stays (8,128)-aligned and the pipeline deep;
    # padded keys are masked in-kernel, padded query rows sliced off below.
    pad_base = 128 if nnz >= 128 else 8
    M_pad = _round_up(nnz, pad_base)
    x = hidden_states
    if M_pad != nnz:
        x = jnp.pad(x, ((0, M_pad - nnz), (0, 0)))

    # bf16 operands for the MXU (f32 accumulation inside the kernels).
    x = x.astype(compute_dtype)
    w = w.astype(compute_dtype)

    qkv = pallas_linear(x, w, b, out_dtype=compute_dtype)            # (M_pad, 3*dim)
    # One-time head-major relayout (O(nnz*dim), XLA): (M_pad,3,H,Dh) -> (3,H,M_pad,Dh).
    qkv_hm = jnp.transpose(qkv.reshape(M_pad, 3, H, Dh), (1, 2, 0, 3))

    out = pallas_flash_sdpa(qkv_hm, nnz=nnz, out_dtype=hidden_states.dtype)
    return out[:nnz]                                                 # (nnz, dim)


# --------------------------------- JAX reference ---------------------------------
def reference_forward(hidden_states, wqkv, bqkv, num_heads):
    nnz, dim = hidden_states.shape
    H = num_heads
    Dh = dim // H
    qkv = hidden_states @ wqkv + bqkv
    qkv = qkv.reshape(nnz, 3, H, Dh)
    q = jnp.transpose(qkv[:, 0], (1, 0, 2))   # (H, nnz, Dh)
    k = jnp.transpose(qkv[:, 1], (1, 0, 2))
    v = jnp.transpose(qkv[:, 2], (1, 0, 2))
    s = jnp.einsum("hqd,hkd->hqk", q, k) / math.sqrt(Dh)
    p = jax.nn.softmax(s, axis=-1)
    a = jnp.einsum("hqk,hkd->hqd", p, v)
    return jnp.transpose(a, (1, 0, 2)).reshape(nnz, dim)


if __name__ == "__main__":
    # Small config consistent with the module: hidden=128, heads=4 (head_dim=32),
    # two sequences of length 9 and 11 -> total_nnz = 20 unpadded tokens
    # (deliberately not 8-aligned so the padding + key-masking path is exercised).
    H = 4
    D = 128
    seqlens = (9, 11)
    nnz = sum(seqlens)
    B = len(seqlens)
    max_seqlen = max(seqlens)

    key = jax.random.PRNGKey(0)
    kx, k1, k2 = jax.random.split(key, 3)
    hidden_states = jax.random.normal(kx, (nnz, D), dtype=jnp.float32)
    # Weights stored as (in, out), i.e. torch Wqkv.weight.T ; bias (3*dim,)
    wqkv = 0.05 * jax.random.normal(k1, (D, 3 * D), dtype=jnp.float32)
    bqkv = 0.05 * jax.random.normal(k2, (3 * D,), dtype=jnp.float32)

    # Arguments mirroring the module signature (unused by the vanilla SDPA branch).
    cu_seqlens = jnp.array([0, seqlens[0], nnz], dtype=jnp.int32)
    indices = jnp.arange(nnz, dtype=jnp.int32)
    attn_mask = jnp.ones((B, max_seqlen), dtype=jnp.int32)
    alibi_bias = jnp.zeros((B, H, max_seqlen, max_seqlen), dtype=jnp.float32)
    slopes = jnp.ones((H,), dtype=jnp.float32)

    ref = reference_forward(hidden_states, wqkv, bqkv, H)

    # f32 compute path (tight tolerance; approx reciprocal is the only deviation).
    out_f32 = bert_alibi_unpad_self_attention(
        hidden_states, cu_seqlens, max_seqlen, indices, attn_mask, alibi_bias, slopes,
        wqkv=wqkv, bqkv=bqkv, num_attention_heads=H, compute_dtype=jnp.float32)
    out_f32 = jax.block_until_ready(out_f32)
    assert out_f32.shape == (nnz, D)
    err32 = float(jnp.max(jnp.abs(out_f32 - ref)))
    assert jnp.allclose(out_f32, ref, atol=1e-2, rtol=1e-2), f"f32 mismatch: {err32}"

    # bf16 compute path (MXU-native, default); looser tolerance vs f32 reference.
    out_bf16 = bert_alibi_unpad_self_attention(
        hidden_states, cu_seqlens, max_seqlen, indices, attn_mask, alibi_bias, slopes,
        wqkv=wqkv, bqkv=bqkv, num_attention_heads=H, compute_dtype=jnp.bfloat16)
    out_bf16 = jax.block_until_ready(out_bf16)
    assert out_bf16.shape == (nnz, D)
    err16 = float(jnp.max(jnp.abs(out_bf16 - ref)))
    assert jnp.allclose(out_bf16, ref, atol=4e-2, rtol=4e-2), f"bf16 mismatch: {err16}"

    print("KERNEL_OK")
</pallas_src>

<mosaic_0001>
module attributes {stable_mosaic.version = 11 : i64} {
  func.func @_linear_kernel(%arg0: i32, %arg1: i32, %arg2: i32, %arg3: memref<8x128xf32, #tpu.memory_space<vmem>>, %arg4: memref<128x128xf32, #tpu.memory_space<vmem>>, %arg5: memref<1x128xf32, #tpu.memory_space<vmem>>, %arg6: memref<8x128xf32, #tpu.memory_space<vmem>>, %arg7: memref<8x128xf32, #tpu.memory_space<vmem>>) attributes {dimension_semantics = [#tpu.dimension_semantics<parallel>, #tpu.dimension_semantics<parallel>, #tpu.dimension_semantics<arbitrary>], iteration_bounds = array<i64: 3, 3, 1>, scalar_prefetch = 0 : i64, scratch_operands = 1 : i64, tpu.core_type = #tpu.core_type<tc>, window_params = [{transform_indices = @transform_0, window_bounds = array<i64: 8, 128>}, {transform_indices = @transform_1, window_bounds = array<i64: 128, 128>}, {transform_indices = @transform_2, window_bounds = array<i64: 1, 128>}, {transform_indices = @transform_3, window_bounds = array<i64: 8, 128>}]} {
    %c0_i32 = arith.constant 0 : i32
    %0 = arith.cmpi eq, %arg2, %c0_i32 : i32
    %1 = arith.extui %0 : i1 to i32
    %c0_i32_0 = arith.constant 0 : i32
    %2 = arith.cmpi ne, %1, %c0_i32_0 : i32
    scf.if %2 {
      %cst_10 = arith.constant 0.000000e+00 : f32
      %12 = vector.broadcast %cst_10 : f32 to vector<8x128xf32>
      %c0_11 = arith.constant 0 : index
      %c0_12 = arith.constant 0 : index
      %13 = vector.load %arg7[%c0_11, %c0_12] : memref<8x128xf32, #tpu.memory_space<vmem>>, vector<8x128xf32>
      tpu.vector_store %arg7[%c0_11, %c0_12], %12 {strides = array<i32>} : memref<8x128xf32, #tpu.memory_space<vmem>>, vector<8x128xf32>,
    } else {
    }
    %c0 = arith.constant 0 : index
    %c0_1 = arith.constant 0 : index
    %3 = vector.load %arg7[%c0, %c0_1] : memref<8x128xf32, #tpu.memory_space<vmem>>, vector<8x128xf32>
    %c0_2 = arith.constant 0 : index
    %c0_3 = arith.constant 0 : index
    %4 = vector.load %arg3[%c0_2, %c0_3] : memref<8x128xf32, #tpu.memory_space<vmem>>, vector<8x128xf32>
    %c0_4 = arith.constant 0 : index
    %c0_5 = arith.constant 0 : index
    %5 = vector.load %arg4[%c0_4, %c0_5] : memref<128x128xf32, #tpu.memory_space<vmem>>, vector<128x128xf32>
    %cst = arith.constant dense<0.000000e+00> : vector<8x128xf32>
    %6 = tpu.matmul %4, %5, %cst {dimension_numbers = #tpu.dot_dimension_numbers<[1], [0], [0], [1], [0, 0, 1, 1], [], []>} : vector<8x128xf32>, vector<128x128xf32>, vector<8x128xf32> -> vector<8x128xf32>
    %7 = arith.addf %3, %6 : vector<8x128xf32>
    %c0_6 = arith.constant 0 : index
    %c0_7 = arith.constant 0 : index
    %8 = vector.load %arg7[%c0_6, %c0_7] : memref<8x128xf32, #tpu.memory_space<vmem>>, vector<8x128xf32>
    tpu.vector_store %arg7[%c0_6, %c0_7], %7 {strides = array<i32>} : memref<8x128xf32, #tpu.memory_space<vmem>>, vector<8x128xf32>,
    %c0_i32_8 = arith.constant 0 : i32
    %9 = arith.cmpi eq, %arg2, %c0_i32_8 : i32
    %10 = arith.extui %9 : i1 to i32
    %c0_i32_9 = arith.constant 0 : i32
    %11 = arith.cmpi ne, %10, %c0_i32_9 : i32
    scf.if %11 {
      %c0_10 = arith.constant 0 : index
      %c0_11 = arith.constant 0 : index
      %12 = vector.load %arg7[%c0_10, %c0_11] : memref<8x128xf32, #tpu.memory_space<vmem>>, vector<8x128xf32>
      %c0_12 = arith.constant 0 : index
      %c0_13 = arith.constant 0 : index
      %13 = vector.load %arg5[%c0_12, %c0_13] : memref<1x128xf32, #tpu.memory_space<vmem>>, vector<1x128xf32>
      %14 = vector.broadcast %13 : vector<1x128xf32> to vector<8x128xf32>
      %15 = arith.addf %12, %14 : vector<8x128xf32>
      %c0_14 = arith.constant 0 : index
      %c0_15 = arith.constant 0 : index
      %16 = vector.load %arg6[%c0_14, %c0_15] : memref<8x128xf32, #tpu.memory_space<vmem>>, vector<8x128xf32>
      tpu.vector_store %arg6[%c0_14, %c0_15], %15 {strides = array<i32>} : memref<8x128xf32, #tpu.memory_space<vmem>>, vector<8x128xf32>,
    } else {
    }
    return
  }
  func.func @transform_0(%arg0: i32, %arg1: i32, %arg2: i32) -> (i32, i32) {
    %c0_i32 = arith.constant 0 : i32
    return %arg0, %arg2 : i32, i32
  }
  func.func @transform_1(%arg0: i32, %arg1: i32, %arg2: i32) -> (i32, i32) {
    %c0_i32 = arith.constant 0 : i32
    return %arg2, %arg1 : i32, i32
  }
  func.func @transform_2(%arg0: i32, %arg1: i32, %arg2: i32) -> (i32, i32) {
    %c0_i32 = arith.constant 0 : i32
    %c0_i32_0 = arith.constant 0 : i32
    return %c0_i32, %arg1 : i32, i32
  }
  func.func @transform_3(%arg0: i32, %arg1: i32, %arg2: i32) -> (i32, i32) {
    %c0_i32 = arith.constant 0 : i32
    return %arg0, %arg1 : i32, i32
  }
}

</mosaic_0001>

<llo_original>
// kernel: tpu_custom_call.1
$region0: #{tpu_custom_call.1}
  #allocation0 [shape = 'u32[]', space=smem, size = 0x4, offset = 0x4, fixed_abs, tag = 'smem constant byte address 0x4 - core index']
  #allocation1 [shape = 'u32[144,128]{1,0:T(1,128)}', space=vmem, size = 0x12000, scoped, tag = 'internal scratch']
  #allocation2 [shape = 'f32[8,128]{1,0:T(8,128)}', space=vmem, size = 0x1000, scoped, tag = 'scratch operand']
  %s0 = inlined_call_operand.hbm [shape: f32[24,128], index: 0, kind: input, shape index: {}]
  %s1 = inlined_call_operand.hbm [shape: f32[128,384], index: 1, kind: input, shape index: {}]
  %s2 = inlined_call_operand.vmem [shape: f32[1,384], index: 2, kind: input, shape index: {}]
  %s3 = inlined_call_operand.hbm [shape: f32[24,384], index: 3, kind: output, shape index: {}]
  %s4 = sld [smem:[#allocation0]]
  $region61: #{tpu_custom_call.1} parent=0
    _
  %s6 = ssub.s32 1, %s4
  %s7 = scalar_select 0, %s6, %s4
  $region1: #{tpu_custom_call.1} parent=0
    #allocation3 [shape = 'u8[8192]{0}', space=vmem, size = 0x2000, scoped, tag = 'input window, operand 0']
    #allocation4 [shape = 's32[2]{0}', space=sflag, size = 0x8, scoped, tag = 'scoped memory for tpu_custom_call.1']
    #allocation5 [shape = 's32[2]{0}', space=sflag, size = 0x8, scoped, tag = 'scoped memory for tpu_custom_call.1']
    #allocation6 [shape = 'u8[131072]{0}', space=vmem, size = 0x20000, scoped, tag = 'input window, operand 1']
    #allocation7 [shape = 's32[2]{0}', space=sflag, size = 0x8, scoped, tag = 'scoped memory for tpu_custom_call.1']
    #allocation8 [shape = 'u8[8192]{0}', space=vmem, size = 0x2000, scoped, tag = 'output window, operand 0']
    %8 = vsyncpa [#allocation4], 0
    %s9 = scalar_lea.sflag [#allocation4], 1
    %10 = vsyncpa %s9, 0
    %11 = vsyncpa [#allocation7], 0
    %s12 = scalar_lea.sflag [#allocation7], 1
    %13 = vsyncpa %s12, 0
    %14 = vsyncpa [#allocation5], 0
    %s15 = scalar_lea.sflag [#allocation5], 1
    %16 = vsyncpa %s15, 0
    loop: start=0, step=1, limit=11
    $region2: #{tpu_custom_call.1} parent=1 // loop_pre_header
      _
    $region3: #{tpu_custom_call.1} parent=1 // loop_header
      %s18 = sphi 0, %s22
      %p19 = scmp.ge.s32.totalorder %s18, 11
      %s25 = sphi 0, %s44
      %s26 = sphi 0, %s40
      %s27 = sphi 0, %s36
      %s28 = sphi 0, %s25
      %s29 = sphi 0, %s26
      %s30 = sphi 0, %s27
      %s31 = sphi 0, %s28
      %s32 = sphi 0, %s29
      %s33 = sphi 0, %s30
      %s49 = sphi 0, %s51
      %s52 = sphi 0, %s49
      %s53 = sphi 0, %s52
      %s69 = sphi 0, %s53
      %s77 = sphi 0, %s79
      %s80 = sphi 0, %s77
      %s81 = sphi 0, %s80
      %s97 = sphi 0, %s81
      %s103 = sphi 0, %s105
      %s106 = sphi 0, %s103
      %s107 = sphi 0, %s106
      %s123 = sphi 0, %s107
      %s131 = sphi 0, %s133
      %s134 = sphi 0, %s131
      %s135 = sphi 0, %s134
      %s151 = sphi 0, %s135
    $region4: #{tpu_custom_call.1} parent=1 // loop_header_branch
      %21 = sbr.rel (%p19) target = $region8
    $region5: #{tpu_custom_call.1} parent=1 // loop_body
      %s23 = ssub.s32 %s18, 1
      %s24 = ssub.s32 %s18, 2
      %s34 = sadd.s32 1, %s27
      %p35 = scmp.ge.s32.totalorder %s34, 1
      %s36 = scalar_select %p35, 0, %s34
      %s37 = sadd.s32 1, %s26
      %s38 = scalar_select %p35, %s37, %s26
      %p39 = scmp.ge.s32.totalorder %s38, 3
      %s40 = scalar_select %p39, 0, %s38
      %s41 = sadd.s32 1, %s25
      %s42 = scalar_select %p39, %s41, %s25
      %p43 = scmp.ge.s32.totalorder %s42, 3
      %s44 = scalar_select %p43, 0, %s42
      %s45 = ssub.s32 %s25, %s44
      %s46 = ssub.s32 %s27, %s36
      %s47 = sor.u32 %s45, %s46
      %p48 = scmp.eq.s32.totalorder %s47, 0
      %s50 = sadd.s32 %s49, 1
      %s51 = scalar_select %p48, %s49, %s50
      %p54 = pneg %p48
      %p55 = scmp.eq.s32.totalorder %s18, 8
      %p56 = por %p54, %p55
      %p57 = scmp.ne.s32.totalorder %s49, %s52
      %p58 = scmp.eq.s32.totalorder %s18, 0
      %p59 = por %p57, %p58
      %p60 = scmp.ne.s32.totalorder %s49, %s52
      %p61 = scmp.eq.s32.totalorder %s23, 8
      %p62 = por %p60, %p61
      %p63 = scmp.ne.s32.totalorder %s52, %s53
      %p64 = scmp.eq.s32.totalorder %s23, 0
      %p65 = por %p63, %p64
      %p66 = scmp.ne.s32.totalorder %s52, %s53
      %p67 = scmp.eq.s32.totalorder %s24, 8
      %p68 = por %p66, %p67
      %p70 = scmp.ne.s32.totalorder %s53, %s69
      %p71 = scmp.eq.s32.totalorder %s24, 0
      %p72 = por %p70, %p71
      %s73 = ssub.s32 %s27, %s36
      %s74 = ssub.s32 %s26, %s40
      %s75 = sor.u32 %s73, %s74
      %p76 = scmp.eq.s32.totalorder %s75, 0
      %s78 = sadd.s32 %s77, 1
      %s79 = scalar_select %p76, %s77, %s78
      %p82 = pneg %p76
      %p83 = scmp.eq.s32.totalorder %s18, 8
      %p84 = por %p82, %p83
      %p85 = scmp.ne.s32.totalorder %s77, %s80
      %p86 = scmp.eq.s32.totalorder %s18, 0
      %p87 = por %p85, %p86
      %p88 = scmp.ne.s32.totalorder %s77, %s80
      %p89 = scmp.eq.s32.totalorder %s23, 8
      %p90 = por %p88, %p89
      %p91 = scmp.ne.s32.totalorder %s80, %s81
      %p92 = scmp.eq.s32.totalorder %s23, 0
      %p93 = por %p91, %p92
      %p94 = scmp.ne.s32.totalorder %s80, %s81
      %p95 = scmp.eq.s32.totalorder %s24, 8
      %p96 = por %p94, %p95
      %p98 = scmp.ne.s32.totalorder %s81, %s97
      %p99 = scmp.eq.s32.totalorder %s24, 0
      %p100 = por %p98, %p99
      %s101 = ssub.s32 %s26, %s40
      %p102 = scmp.eq.s32.totalorder %s101, 0
      %s104 = sadd.s32 %s103, 1
      %s105 = scalar_select %p102, %s103, %s104
      %p108 = pneg %p102
      %p109 = scmp.eq.s32.totalorder %s18, 8
      %p110 = por %p108, %p109
      %p111 = scmp.ne.s32.totalorder %s103, %s106
      %p112 = scmp.eq.s32.totalorder %s18, 0
      %p113 = por %p111, %p112
      %p114 = scmp.ne.s32.totalorder %s103, %s106
      %p115 = scmp.eq.s32.totalorder %s23, 8
      %p116 = por %p114, %p115
      %p117 = scmp.ne.s32.totalorder %s106, %s107
      %p118 = scmp.eq.s32.totalorder %s23, 0
      %p119 = por %p117, %p118
      %p120 = scmp.ne.s32.totalorder %s106, %s107
      %p121 = scmp.eq.s32.totalorder %s24, 8
      %p122 = por %p120, %p121
      %p124 = scmp.ne.s32.totalorder %s107, %s123
      %p125 = scmp.eq.s32.totalorder %s24, 0
      %p126 = por %p124, %p125
      %s127 = ssub.s32 %s25, %s44
      %s128 = ssub.s32 %s26, %s40
      %s129 = sor.u32 %s127, %s128
      %p130 = scmp.eq.s32.totalorder %s129, 0
      %s132 = sadd.s32 %s131, 1
      %s133 = scalar_select %p130, %s131, %s132
      %p136 = pneg %p130
      %p137 = scmp.eq.s32.totalorder %s18, 8
      %p138 = por %p136, %p137
      %p139 = scmp.ne.s32.totalorder %s131, %s134
      %p140 = scmp.eq.s32.totalorder %s18, 0
      %p141 = por %p139, %p140
      %p142 = scmp.ne.s32.totalorder %s131, %s134
      %p143 = scmp.eq.s32.totalorder %s23, 8
      %p144 = por %p142, %p143
      %p145 = scmp.ne.s32.totalorder %s134, %s135
      %p146 = scmp.eq.s32.totalorder %s23, 0
      %p147 = por %p145, %p146
      %p148 = scmp.ne.s32.totalorder %s134, %s135
      %p149 = scmp.eq.s32.totalorder %s24, 8
      %p150 = por %p148, %p149
      %p152 = scmp.ne.s32.totalorder %s135, %s151
      %p153 = scmp.eq.s32.totalorder %s24, 0
      %p154 = por %p152, %p153
      %p155 = scmp.le.s32.totalorder 1, %s18
      %p156 = scmp.lt.s32.totalorder %s18, 10
      %p157 = pnand %p155, %p156
      %p158 = pneg %p157
      // Predicated region
      $region9: #{tpu_custom_call.1} parent=5 // pred_check
        _
      $region10: #{tpu_custom_call.1} parent=5 // pred_check_branch
        %160 = sbr.rel (%p157) target = $region12
      $region11: #{tpu_custom_call.1} parent=5 // pred_region
        %s161 = ssub.s32 %s18, 1
      $region12: #{tpu_custom_call.1} parent=5 // pred_fallthru
        _
      %p162 = scmp.lt.s32.totalorder %s18, 9
      // Predicated region
      $region13: #{tpu_custom_call.1} parent=5 // pred_check
        %p163 = pneg %p162
      $region14: #{tpu_custom_call.1} parent=5 // pred_check_branch
        %165 = sbr.rel (%p163) target = $region16
      $region15: #{tpu_custom_call.1} parent=5 // pred_region
        // Predicated region
        $region17: #{tpu_custom_call.1} parent=15 // pred_check
          %p166 = pneg %p59
        $region18: #{tpu_custom_call.1} parent=15 // pred_check_branch
          %168 = sbr.rel (%p166) target = $region20
        $region19: #{tpu_custom_call.1} parent=15 // pred_region
          %s169 = sand.u32 %s49, 1
          %s170 = scalar_lea.sflag [#allocation4], %s169
          %s171 = sand.u32 %s49, 1
          %s172 = smul.addr %s171, 8
          %s173 = scalar_lea.vmem [#allocation3], %s172
          %s175 = ssub.s32 128, 128
          %176 = vsyncadd %s170, %s175
          %s177 = sadd.s32 %s27, %s25
          %s178 = smul.addr %s177, 128
          %s179 = scalar_lea.hbm %s0, %s178
          %s181 = sshll.u32 %s173, 4
          %s182 = int_to_ptr.vmem [resolvable:$true] %s181
          %184 = dma.hbm_to_vmem [thread:$0]  %s179, 128, %s182, %s170
        $region20: #{tpu_custom_call.1} parent=15 // pred_fallthru
          _
        // Predicated region
        $region21: #{tpu_custom_call.1} parent=15 // pred_check
          %p185 = pneg %p87
        $region22: #{tpu_custom_call.1} parent=15 // pred_check_branch
          %187 = sbr.rel (%p185) target = $region24
        $region23: #{tpu_custom_call.1} parent=15 // pred_region
          %s188 = sand.u32 %s77, 1
          %s189 = scalar_lea.sflag [#allocation7], %s188
          %s190 = sand.u32 %s77, 1
          %s191 = smul.addr %s190, 128
          %s192 = scalar_lea.vmem [#allocation6], %s191
          %s193 = smul.u32 16, %s27
          %s195 = ssub.s32 2048, 2048
          %196 = vsyncadd %s189, %s195
          %s197 = smul.addr %s193, 3
          %s198 = sadd.s32 %s26, %s197
          %s199 = smul.addr %s198, 128
          %s200 = scalar_lea.hbm %s1, %s199
          %s201 = sshll.u32 %s192, 4
          %s202 = int_to_ptr.vmem [resolvable:$true] %s201
          %207 = dma.hbm_to_vmem [thread:$0]  %s200, 2048, %s202, %s189, 384, 128, 8
        $region24: #{tpu_custom_call.1} parent=15 // pred_fallthru
          _
        // Predicated region
        $region25: #{tpu_custom_call.1} parent=15 // pred_check
          %p208 = pneg %p113
        $region26: #{tpu_custom_call.1} parent=15 // pred_check_branch
          %210 = sbr.rel (%p208) target = $region28
        $region27: #{tpu_custom_call.1} parent=15 // pred_region
          %p211 = scmp.lt.s32.totalorder %s26, 2
          %s212 = scalar_select %p211, %s26, 2
          %s213 = scalar_lea.vmem %s2, %s212
        $region28: #{tpu_custom_call.1} parent=15 // pred_fallthru
          _
      $region16: #{tpu_custom_call.1} parent=5 // pred_fallthru
        _
      %p214 = scmp.le.s32.totalorder 1, %s18
      %p215 = scmp.lt.s32.totalorder %s18, 10
      %p216 = pnand %p214, %p215
      %p217 = pneg %p216
      // Predicated region
      $region29: #{tpu_custom_call.1} parent=5 // pred_check
        _
      $region30: #{tpu_custom_call.1} parent=5 // pred_check_branch
        %219 = sbr.rel (%p216) target = $region32
      $region31: #{tpu_custom_call.1} parent=5 // pred_region
        %s220 = ssub.s32 %s18, 1
        %s221 = sand.u32 %s52, 1
        %s222 = scalar_lea.sflag [#allocation4], %s221
        %s223 = sand.u32 %s52, 1
        %s224 = smul.addr %s223, 8
        %s225 = scalar_lea.vmem [#allocation3], %s224
        // Predicated region
        $region33: #{tpu_custom_call.1} parent=31 // pred_check
          %p226 = pneg %p65
        $region34: #{tpu_custom_call.1} parent=31 // pred_check_branch
          %228 = sbr.rel (%p226) target = $region36
        $region35: #{tpu_custom_call.1} parent=31 // pred_region
          %229 = dma.done %s222, 128
        $region36: #{tpu_custom_call.1} parent=31 // pred_fallthru
          _
        %s230 = sand.u32 %s80, 1
        %s231 = scalar_lea.sflag [#allocation7], %s230
        %s232 = sand.u32 %s80, 1
        %s233 = smul.addr %s232, 128
        %s234 = scalar_lea.vmem [#allocation6], %s233
        // Predicated region
        $region37: #{tpu_custom_call.1} parent=31 // pred_check
          %p235 = pneg %p93
        $region38: #{tpu_custom_call.1} parent=31 // pred_check_branch
          %237 = sbr.rel (%p235) target = $region40
        $region39: #{tpu_custom_call.1} parent=31 // pred_region
          %238 = dma.done %s231, 2048
        $region40: #{tpu_custom_call.1} parent=31 // pred_fallthru
          _
        %s239 = sand.u32 %s52, 1
        %s240 = scalar_lea.sflag [#allocation4], %s239
        %s241 = sand.u32 %s52, 1
        %s242 = smul.addr %s241, 8
        %s243 = scalar_lea.vmem [#allocation3], %s242
        %p244 = pneg %p65
        %p245 = pneg %p62
        %s246 = sand.u32 %s80, 1
        %s247 = scalar_lea.sflag [#allocation7], %s246
        %s248 = sand.u32 %s80, 1
        %s249 = smul.addr %s248, 128
        %s250 = scalar_lea.vmem [#allocation6], %s249
        %p251 = pneg %p93
        %p252 = pneg %p90
        %p253 = scmp.lt.s32.totalorder %s29, 2
        %s254 = scalar_select %p253, %s29, 2
        %s255 = scalar_lea.vmem %s2, %s254
        %p256 = pneg %p119
        %p257 = pneg %p116
        %p258 = pneg %p147
        %p259 = pneg %p144
        %s260 = sand.u32 %s134, 1
        %s261 = scalar_lea.sflag [#allocation5], %s260
        %s262 = sand.u32 %s134, 1
        %s263 = smul.addr %s262, 8
        %s264 = scalar_lea.vmem [#allocation8], %s263
        %s265 = smul.u32 16, %s30
        %p266 = scmp.lt.s32.totalorder %s29, 2
        %s267 = scalar_select %p266, %s29, 2
        %s268 = scalar_lea.vmem %s2, %s267
        %p269 = scmp.eq.s32.totalorder %s30, 0
        // Predicated region
        $region41: #{tpu_custom_call.1} parent=31 // pred_check
          %p270 = pneg %p269
        $region42: #{tpu_custom_call.1} parent=31 // pred_check_branch
          %272 = sbr.rel (%p270) target = $region44
        $region43: #{tpu_custom_call.1} parent=31 // pred_region
          %273 = vst [vmem:[#allocation2] sm:$0xff] 0.0
        $region44: #{tpu_custom_call.1} parent=31 // pred_fallthru
          _
        %v274 = vld [vmem:[#allocation2] sm:$0xff]
        %v275 = vld [vmem:[%s225] sm:$0xff]
        %v276 = vld [vmem:[%s234] sm:$0xff]
        %v277 = vld [vmem:[%s234 + $0x8] sm:$0xff]
        %v278 = vld [vmem:[%s234 + $0x10] sm:$0xff]
        %v279 = vld [vmem:[%s234 + $0x18] sm:$0xff]
        %v280 = vld [vmem:[%s234 + $0x20] sm:$0xff]
        %v281 = vld [vmem:[%s234 + $0x28] sm:$0xff]
        %v282 = vld [vmem:[%s234 + $0x30] sm:$0xff]
        %v283 = vld [vmem:[%s234 + $0x38] sm:$0xff]
        %v284 = vld [vmem:[%s234 + $0x40] sm:$0xff]
        %v285 = vld [vmem:[%s234 + $0x48] sm:$0xff]
        %v286 = vld [vmem:[%s234 + $0x50] sm:$0xff]
        %v287 = vld [vmem:[%s234 + $0x58] sm:$0xff]
        %v288 = vld [vmem:[%s234 + $0x60] sm:$0xff]
        %v289 = vld [vmem:[%s234 + $0x68] sm:$0xff]
        %v290 = vld [vmem:[%s234 + $0x70] sm:$0xff]
        %v291 = vld [vmem:[%s234 + $0x78] sm:$0xff]
        %292 = vmatprep.subr.mxu0 0.0
        %293 = vmatpush1.msra.mxu0 %v291
        %294 = vmatprep.subr.mxu0 0.0
        %295 = vmatpush1.msra.mxu0 %v290
        %296 = vmatprep.subr.mxu0 0.0
        %297 = vmatpush1.msra.mxu0 %v289
        %298 = vmatprep.subr.mxu0 0.0
        %299 = vmatpush1.msra.mxu0 %v288
        %300 = vmatprep.subr.mxu0 0.0
        %301 = vmatpush1.msra.mxu0 %v287
        %302 = vmatprep.subr.mxu0 0.0
        %303 = vmatpush1.msra.mxu0 %v286
        %304 = vmatprep.subr.mxu0 0.0
        %305 = vmatpush1.msra.mxu0 %v285
        %306 = vmatprep.subr.mxu0 0.0
        %307 = vmatpush1.msra.mxu0 %v284
        %308 = vmatprep.subr.mxu0 0.0
        %309 = vmatpush1.msra.mxu0 %v283
        %310 = vmatprep.subr.mxu0 0.0
        %311 = vmatpush1.msra.mxu0 %v282
        %312 = vmatprep.subr.mxu0 0.0
        %313 = vmatpush1.msra.mxu0 %v281
        %314 = vmatprep.subr.mxu0 0.0
        %315 = vmatpush1.msra.mxu0 %v280
        %316 = vmatprep.subr.mxu0 0.0
        %317 = vmatpush1.msra.mxu0 %v279
        %318 = vmatprep.subr.mxu0 0.0
        %319 = vmatpush1.msra.mxu0 %v278
        %320 = vmatprep.subr.mxu0 0.0
        %321 = vmatpush1.msra.mxu0 %v277
        %322 = vmatprep.subr.mxu0 0.0
        %323 = vmatpush1.msra.mxu0 %v276
        %324 = vmatprep.subr.mxu0 0.0
        %325 = vmatpush2.msra.mxu0 0.0
        %326 = vmatprep.subr.mxu0 0.0
        %327 = vmatpush2.msra.mxu0 0.0
        %328 = vmatprep.subr.mxu0 0.0
        %329 = vmatpush2.msra.mxu0 0.0
        %330 = vmatprep.subr.mxu0 0.0
        %331 = vmatpush2.msra.mxu0 0.0
        %332 = vmatprep.subr.mxu0 0.0
        %333 = vmatpush2.msra.mxu0 0.0
        %334 = vmatprep.subr.mxu0 0.0
        %335 = vmatpush2.msra.mxu0 0.0
        %336 = vmatprep.subr.mxu0 0.0
        %337 = vmatpush2.msra.mxu0 0.0
        %338 = vmatprep.subr.mxu0 0.0
        %339 = vmatpush2.msra.mxu0 0.0
        %340 = vmatprep.subr.mxu0 0.0
        %341 = vmatpush2.msra.mxu0 0.0
        %342 = vmatprep.subr.mxu0 0.0
        %343 = vmatpush2.msra.mxu0 0.0
        %344 = vmatprep.subr.mxu0 0.0
        %345 = vmatpush2.msra.mxu0 0.0
        %346 = vmatprep.subr.mxu0 0.0
        %347 = vmatpush2.msra.mxu0 0.0
        %348 = vmatprep.subr.mxu0 0.0
        %349 = vmatpush2.msra.mxu0 0.0
        %350 = vmatprep.subr.mxu0 0.0
        %351 = vmatpush2.msra.mxu0 0.0
        %352 = vmatprep.subr.mxu0 0.0
        %353 = vmatpush2.msra.mxu0 0.0
        %354 = vmatprep.subr.mxu0 0.0
        %355 = vmatpush2.msra.mxu0 0.0
        %356 = vmatprep.mubr.f32.mxu0 0.0
        %357 = vmatmul.mubr.f32.gmra.mxu0 %v275
        %v358 = vpop.f32.mrf.mxu0
        %v359 = vadd.f32 0.0, %v358
        %v360 = vpop.f32.mrf.mxu0
        %361 = vdwg.mxu0
        %v362 = vadd.f32 %v274, %v359
        %363 = vst [vmem:[#allocation2] sm:$0xff] %v362
        // Predicated region
        $region45: #{tpu_custom_call.1} parent=31 // pred_check
          %p364 = pneg %p269
        $region46: #{tpu_custom_call.1} parent=31 // pred_check_branch
          %366 = sbr.rel (%p364) target = $region48
        $region47: #{tpu_custom_call.1} parent=31 // pred_region
          %v367 = vld [vmem:[#allocation2] sm:$0xff]
          %v368 = vld [vmem:[%s268] sm:$0x1]
          %v370 = vlaneseq
          %v371 = vshrl.u32 %v370, 7
          %v372 = vsub.s32 0, %v371
          %v373 = vrot.slane %v368, %v372
          %v375 = vadd.f32 %v367, %v373
          %376 = vst [vmem:[%s264] sm:$0xff] %v375
        $region48: #{tpu_custom_call.1} parent=31 // pred_fallthru
          _
        %s377 = sand.u32 %s134, 1
        %s378 = scalar_lea.sflag [#allocation5], %s377
        %s379 = sand.u32 %s134, 1
        %s380 = smul.addr %s379, 8
        %s381 = scalar_lea.vmem [#allocation8], %s380
        // Predicated region
        $region49: #{tpu_custom_call.1} parent=31 // pred_check
          %p382 = pneg %p144
        $region50: #{tpu_custom_call.1} parent=31 // pred_check_branch
          %384 = sbr.rel (%p382) target = $region52
        $region51: #{tpu_custom_call.1} parent=31 // pred_region
          %s386 = ssub.s32 128, 128
          %387 = vsyncadd %s378, %s386
          %s388 = smul.addr %s28, 3
          %s389 = sadd.s32 %s29, %s388
          %s390 = smul.addr %s389, 128
          %s391 = scalar_lea.hbm %s3, %s390
          %s393 = sshll.u32 %s381, 4
          %s394 = int_to_ptr.vmem [resolvable:$true] %s393
          %396 = dma.vmem_to_hbm [thread:$0]  %s394, 128, %s391, %s378
        $region52: #{tpu_custom_call.1} parent=31 // pred_fallthru
          _
      $region32: #{tpu_custom_call.1} parent=5 // pred_fallthru
        _
      %p397 = scmp.le.s32.totalorder 2, %s18
      // Predicated region
      $region53: #{tpu_custom_call.1} parent=5 // pred_check
        %p398 = pneg %p397
      $region54: #{tpu_custom_call.1} parent=5 // pred_check_branch
        %400 = sbr.rel (%p398) target = $region56
      $region55: #{tpu_custom_call.1} parent=5 // pred_region
        %s401 = ssub.s32 %s18, 2
        // Predicated region
        $region57: #{tpu_custom_call.1} parent=55 // pred_check
          %p402 = pneg %p150
        $region58: #{tpu_custom_call.1} parent=55 // pred_check_branch
          %404 = sbr.rel (%p402) target = $region60
        $region59: #{tpu_custom_call.1} parent=55 // pred_region
          %s405 = sand.u32 %s135, 1
          %s406 = scalar_lea.sflag [#allocation5], %s405
          %s407 = sand.u32 %s135, 1
          %s408 = smul.addr %s407, 8
          %s409 = scalar_lea.vmem [#allocation8], %s408
          %410 = dma.done %s406, 128
        $region60: #{tpu_custom_call.1} parent=55 // pred_fallthru
          _
      $region56: #{tpu_custom_call.1} parent=5 // pred_fallthru
        _
    $region6: #{tpu_custom_call.1} parent=1 // loop_footer
      %s22 = sadd.s32 1, %s18
    $region7: #{tpu_custom_call.1} parent=1 // loop_footer_branch
      %17 = sbr.rel target = $region3
    $region8: #{tpu_custom_call.1} parent=1 // loop_exit
      _
    %411 = vsyncpa [#allocation4], 1
    %s412 = scalar_lea.sflag [#allocation4], 1
    %413 = vsyncpa %s412, 1
    %414 = vsyncpa [#allocation7], 1
    %s415 = scalar_lea.sflag [#allocation7], 1
    %416 = vsyncpa %s415, 1
    %417 = vsyncpa [#allocation5], 1
    %s418 = scalar_lea.sflag [#allocation5], 1
    %419 = vsyncpa %s418, 1

</llo_original>
